<compile_context>
chip_gen: v7x
topology: tpu7x:2x2x1
jax: 0.10.0
libtpu: 0.0.40
codegen_flags: <defaults>
</compile_context>

<pallas_src>
import jax
import jax.numpy as jnp
from jax.experimental import pallas as pl
from jax.experimental.pallas import tpu as pltpu

NUM_KPTS = 17
THRESHOLD = jnp.array(
    [0.0085, 0.00831, 0.0083, 0.00743, 0.00737, 0.00742, 0.00748, 0.01097,
     0.01103, 0.01414, 0.01356, 0.01126, 0.01127, 0.01616, 0.01663, 0.00533,
     0.00565],
    dtype=jnp.float32,
)

_MAX_LANE_BLOCK = 1024  # cap on the per-step batch (lane) block; multiple of 128


def _round_up(x: int, m: int) -> int:
    return ((x + m - 1) // m) * m


def _make_kernel(inv_n: float):
    """Builds the kernel with the 1/N mean baked in as a compile-time constant."""

    def kernel(thr_ref, p_ref, t_ref, out_ref):
        # thr_ref: (17, 1)  p_ref / t_ref: (2, 17, LB)  out_ref: (1, 1) in SMEM
        @pl.when(pl.program_id(0) == 0)
        def _init():
            out_ref[0, 0] = jnp.float32(0.0)

        # L1 error summed over the (x, y) coordinate axis -> (17, LB)
        err = jnp.abs(p_ref[0] - t_ref[0]) + jnp.abs(p_ref[1] - t_ref[1])
        # fused mask multiply; threshold broadcasts over the lane (batch) axis
        w = jnp.where(err > thr_ref[...], err, err * 0.001)
        # zero-padded batch lanes have err == 0 and contribute exactly 0
        out_ref[0, 0] += jnp.sum(w)

        @pl.when(pl.program_id(0) == pl.num_programs(0) - 1)
        def _finalize():
            out_ref[0, 0] = out_ref[0, 0] * inv_n

    return kernel


@jax.jit
def loss_kpts2d(pred_kpt, target_kpt):
    """pred_kpt: (B, 17, 2), target_kpt: (B, 17, 3) -> scalar f32 loss."""
    pred_kpt = pred_kpt.astype(jnp.float32)
    target_kpt = target_kpt.astype(jnp.float32)
    B = pred_kpt.shape[0]

    # Lane-dense layout: (coord, kpt, batch) so the growing axis sits on lanes.
    p = jnp.transpose(pred_kpt, (2, 1, 0))              # (2, 17, B)
    t = jnp.transpose(target_kpt[..., :2], (2, 1, 0))   # (2, 17, B)

    lane_block = min(_MAX_LANE_BLOCK, _round_up(B, 128))
    b_padded = _round_up(B, lane_block)
    if b_padded != B:
        pad = ((0, 0), (0, 0), (0, b_padded - B))
        p = jnp.pad(p, pad)
        t = jnp.pad(t, pad)
    num_blocks = b_padded // lane_block

    thr = THRESHOLD.reshape(NUM_KPTS, 1)
    inv_n = 1.0 / float(B * NUM_KPTS)

    out = pl.pallas_call(
        _make_kernel(inv_n),
        out_shape=jax.ShapeDtypeStruct((1, 1), jnp.float32),
        grid_spec=pl.GridSpec(
            grid=(num_blocks,),
            in_specs=[
                # threshold: tiny, same block every step (not re-fetched)
                pl.BlockSpec((NUM_KPTS, 1), lambda i: (0, 0)),
                # pred / target xy planes: block over the batch (lane) axis
                pl.BlockSpec((2, NUM_KPTS, lane_block), lambda i: (0, 0, i)),
                pl.BlockSpec((2, NUM_KPTS, lane_block), lambda i: (0, 0, i)),
            ],
            out_specs=pl.BlockSpec(
                (1, 1), lambda i: (0, 0), memory_space=pltpu.MemorySpace.SMEM
            ),
        ),
        compiler_params=pltpu.CompilerParams(
            # batch-block axis feeds the running scalar accumulator
            dimension_semantics=("arbitrary",),
        ),
        cost_estimate=pl.CostEstimate(
            flops=8 * B * NUM_KPTS,
            transcendentals=0,
            bytes_accessed=2 * (2 * NUM_KPTS * b_padded * 4) + NUM_KPTS * 4 + 4,
        ),
    )(thr, p, t)
    return out[0, 0]


def _loss_kpts2d_ref(pred_kpt, target_kpt):
    target_kpt2d = target_kpt[..., :2]
    err_kpt = jnp.sum(jnp.abs(pred_kpt - target_kpt2d), axis=-1)
    thr = THRESHOLD[None, :]
    mask_values = jnp.where(err_kpt > thr, 1.0, 0.001)
    return jnp.mean(err_kpt * mask_values)


if __name__ == "__main__":
    key = jax.random.PRNGKey(0)
    k1, k2, k3 = jax.random.split(key, 3)
    B = 8
    pred_kpt = jax.random.normal(k1, (B, NUM_KPTS, 2), dtype=jnp.float32) * 0.02
    target_xy = jax.random.normal(k2, (B, NUM_KPTS, 2), dtype=jnp.float32) * 0.02
    confidence = jax.random.uniform(k3, (B, NUM_KPTS, 1), dtype=jnp.float32)
    target_kpt = jnp.concatenate([target_xy, confidence], axis=-1)  # (B, 17, 3)

    out = jax.block_until_ready(loss_kpts2d(pred_kpt, target_kpt))

    ref = _loss_kpts2d_ref(pred_kpt, target_kpt)
    assert jnp.allclose(out, ref, rtol=1e-5, atol=1e-6), (out, ref)
    print("KERNEL_OK")
</pallas_src>

<mosaic_0001>
module attributes {stable_mosaic.version = 11 : i64} {
  func.func @kernel(%arg0: i32, %arg1: memref<17x1xf32, #tpu.memory_space<vmem>>, %arg2: memref<2x17x128xf32, #tpu.memory_space<vmem>>, %arg3: memref<2x17x128xf32, #tpu.memory_space<vmem>>, %arg4: memref<1x1xf32, #tpu.memory_space<smem>>) attributes {dimension_semantics = [#tpu.dimension_semantics<arbitrary>], iteration_bounds = array<i64: 1>, scalar_prefetch = 0 : i64, scratch_operands = 0 : i64, tpu.core_type = #tpu.core_type<tc>, window_params = [{pipeline_mode = #tpu.pipeline_mode<synchronous>, transform_indices = @transform_0, window_bounds = array<i64: 17, 1>}, {transform_indices = @transform_1, window_bounds = array<i64: 2, 17, 128>}, {transform_indices = @transform_2, window_bounds = array<i64: 2, 17, 128>}, {transform_indices = @transform_3, window_bounds = array<i64: 1, 1>}]} {
    %c0_i32 = arith.constant 0 : i32
    %0 = arith.cmpi eq, %arg0, %c0_i32 : i32
    %1 = arith.extui %0 : i1 to i32
    %c0_i32_0 = arith.constant 0 : i32
    %2 = arith.cmpi ne, %1, %c0_i32_0 : i32
    scf.if %2 {
      %cst_20 = arith.constant 0.000000e+00 : f32
      %c0_21 = arith.constant 0 : index
      %c0_22 = arith.constant 0 : index
      %32 = memref.load %arg4[%c0_21, %c0_22] : memref<1x1xf32, #tpu.memory_space<smem>>
      memref.store %cst_20, %arg4[%c0_21, %c0_22] : memref<1x1xf32, #tpu.memory_space<smem>>
    } else {
    }
    %c0 = arith.constant 0 : index
    %c0_1 = arith.constant 0 : index
    %c0_2 = arith.constant 0 : index
    %3 = vector.load %arg2[%c0, %c0_1, %c0_2] : memref<2x17x128xf32, #tpu.memory_space<vmem>>, vector<1x17x128xf32>
    %4 = vector.shape_cast %3 : vector<1x17x128xf32> to vector<17x128xf32>
    %c0_3 = arith.constant 0 : index
    %c0_4 = arith.constant 0 : index
    %c0_5 = arith.constant 0 : index
    %5 = vector.load %arg3[%c0_3, %c0_4, %c0_5] : memref<2x17x128xf32, #tpu.memory_space<vmem>>, vector<1x17x128xf32>
    %6 = vector.shape_cast %5 : vector<1x17x128xf32> to vector<17x128xf32>
    %7 = arith.subf %4, %6 : vector<17x128xf32>
    %8 = math.absf %7 : vector<17x128xf32>
    %c1 = arith.constant 1 : index
    %c0_6 = arith.constant 0 : index
    %c0_7 = arith.constant 0 : index
    %9 = vector.load %arg2[%c1, %c0_6, %c0_7] : memref<2x17x128xf32, #tpu.memory_space<vmem>>, vector<1x17x128xf32>
    %10 = vector.shape_cast %9 : vector<1x17x128xf32> to vector<17x128xf32>
    %c1_8 = arith.constant 1 : index
    %c0_9 = arith.constant 0 : index
    %c0_10 = arith.constant 0 : index
    %11 = vector.load %arg3[%c1_8, %c0_9, %c0_10] : memref<2x17x128xf32, #tpu.memory_space<vmem>>, vector<1x17x128xf32>
    %12 = vector.shape_cast %11 : vector<1x17x128xf32> to vector<17x128xf32>
    %13 = arith.subf %10, %12 : vector<17x128xf32>
    %14 = math.absf %13 : vector<17x128xf32>
    %15 = arith.addf %8, %14 : vector<17x128xf32>
    %c0_11 = arith.constant 0 : index
    %c0_12 = arith.constant 0 : index
    %16 = vector.load %arg1[%c0_11, %c0_12] : memref<17x1xf32, #tpu.memory_space<vmem>>, vector<17x1xf32>
    %17 = vector.broadcast %16 : vector<17x1xf32> to vector<17x128xf32>
    %18 = arith.cmpf ogt, %15, %17 : vector<17x128xf32>
    %cst = arith.constant 1.000000e-03 : f32
    %19 = vector.broadcast %cst : f32 to vector<17x128xf32>
    %20 = arith.mulf %15, %19 : vector<17x128xf32>
    %21 = arith.select %18, %15, %20 : vector<17x128xi1>, vector<17x128xf32>
    %c0_13 = arith.constant 0 : index
    %c0_14 = arith.constant 0 : index
    %22 = memref.load %arg4[%c0_13, %c0_14] : memref<1x1xf32, #tpu.memory_space<smem>>
    %23 = vector.shape_cast %21 : vector<17x128xf32> to vector<1x17x128xf32>
    %cst_15 = arith.constant dense<0.000000e+00> : vector<1xf32>
    %24 = vector.multi_reduction <add>, %23, %cst_15 [1, 2] : vector<1x17x128xf32> to vector<1xf32>
    %25 = vector.shape_cast %24 : vector<1xf32> to vector<1x1x1xf32>
    %26 = vector.extract %25[0, 0, 0] : f32 from vector<1x1x1xf32>
    %27 = arith.addf %22, %26 : f32
    %c0_16 = arith.constant 0 : index
    %c0_17 = arith.constant 0 : index
    %28 = memref.load %arg4[%c0_16, %c0_17] : memref<1x1xf32, #tpu.memory_space<smem>>
    memref.store %27, %arg4[%c0_16, %c0_17] : memref<1x1xf32, #tpu.memory_space<smem>>
    %c0_i32_18 = arith.constant 0 : i32
    %29 = arith.cmpi eq, %arg0, %c0_i32_18 : i32
    %30 = arith.extui %29 : i1 to i32
    %c0_i32_19 = arith.constant 0 : i32
    %31 = arith.cmpi ne, %30, %c0_i32_19 : i32
    scf.if %31 {
      %c0_20 = arith.constant 0 : index
      %c0_21 = arith.constant 0 : index
      %32 = memref.load %arg4[%c0_20, %c0_21] : memref<1x1xf32, #tpu.memory_space<smem>>
      %cst_22 = arith.constant 0.0073529412 : f32
      %33 = arith.mulf %32, %cst_22 : f32
      %c0_23 = arith.constant 0 : index
      %c0_24 = arith.constant 0 : index
      %34 = memref.load %arg4[%c0_23, %c0_24] : memref<1x1xf32, #tpu.memory_space<smem>>
      memref.store %33, %arg4[%c0_23, %c0_24] : memref<1x1xf32, #tpu.memory_space<smem>>
    } else {
    }
    return
  }
  func.func @transform_0(%arg0: i32) -> (i32, i32) {
    %c0_i32 = arith.constant 0 : i32
    %c0_i32_0 = arith.constant 0 : i32
    %c0_i32_1 = arith.constant 0 : i32
    return %c0_i32, %c0_i32_0 : i32, i32
  }
  func.func @transform_1(%arg0: i32) -> (i32, i32, i32) {
    %c0_i32 = arith.constant 0 : i32
    %c0_i32_0 = arith.constant 0 : i32
    %c0_i32_1 = arith.constant 0 : i32
    return %c0_i32, %c0_i32_0, %arg0 : i32, i32, i32
  }
  func.func @transform_2(%arg0: i32) -> (i32, i32, i32) {
    %c0_i32 = arith.constant 0 : i32
    %c0_i32_0 = arith.constant 0 : i32
    %c0_i32_1 = arith.constant 0 : i32
    return %c0_i32, %c0_i32_0, %arg0 : i32, i32, i32
  }
  func.func @transform_3(%arg0: i32) -> (i32, i32) {
    %c0_i32 = arith.constant 0 : i32
    %c0_i32_0 = arith.constant 0 : i32
    %c0_i32_1 = arith.constant 0 : i32
    return %c0_i32, %c0_i32_0 : i32, i32
  }
}

</mosaic_0001>

<llo_original>
// kernel: loss_kpts2d.1
$region0: #{loss_kpts2d.1}
  #allocation0 [shape = 'u32[]', space=smem, size = 0x4, offset = 0x4, fixed_abs, tag = 'smem constant byte address 0x4 - core index']
  #allocation1 [shape = 'u32[144,128]{1,0:T(1,128)}', space=vmem, size = 0x12000, scoped, tag = 'internal scratch']
  %s0 = inlined_call_operand.vmem [shape: f32[17,1], index: 0, kind: input, shape index: {}]
  %s1 = inlined_call_operand.vmem [shape: f32[2,17,128], index: 1, kind: input, shape index: {}]
  %s2 = inlined_call_operand.vmem [shape: f32[2,17,128], index: 2, kind: input, shape index: {}]
  %s3 = inlined_call_operand.hbm [shape: f32[1,1], index: 3, kind: output, shape index: {}]
  %s4 = sld [smem:[#allocation0]]
  $region30: #{loss_kpts2d.1} parent=0
    _
  %s6 = ssub.s32 1, %s4
  %s7 = scalar_select 0, %s6, %s4
  $region1: #{loss_kpts2d.1} parent=0
    #allocation2 [shape = 'u8[512]{0}', space=smem, size = 0x200, scoped, tag = 'output window, operand 0, single buffered']
    #allocation3 [shape = 's32[1]{0}', space=sflag, size = 0x4, scoped, tag = 'scoped memory for loss_kpts2d.1']
    %8 = vsyncpa [#allocation3], 0
    // Predicated region
    $region2: #{loss_kpts2d.1} parent=1 // pred_check
      _
    $region3: #{loss_kpts2d.1} parent=1 // pred_check_branch
      %10 = sbr.rel (0) target = $region5
    $region4: #{loss_kpts2d.1} parent=1 // pred_region
      _
    $region5: #{loss_kpts2d.1} parent=1 // pred_fallthru
      _
    // Predicated region
    $region6: #{loss_kpts2d.1} parent=1 // pred_check
      _
    $region7: #{loss_kpts2d.1} parent=1 // pred_check_branch
      %12 = sbr.rel (0) target = $region9
    $region8: #{loss_kpts2d.1} parent=1 // pred_region
      _
    $region9: #{loss_kpts2d.1} parent=1 // pred_fallthru
      _
    // Predicated region
    $region10: #{loss_kpts2d.1} parent=1 // pred_check
      _
    $region11: #{loss_kpts2d.1} parent=1 // pred_check_branch
      %14 = sbr.rel (0) target = $region13
    $region12: #{loss_kpts2d.1} parent=1 // pred_region
      _
    $region13: #{loss_kpts2d.1} parent=1 // pred_fallthru
      _
    %p15 = scmp.eq.s32.totalorder 0, 0
    // Predicated region
    $region14: #{loss_kpts2d.1} parent=1 // pred_check
      %p16 = pneg %p15
    $region15: #{loss_kpts2d.1} parent=1 // pred_check_branch
      %18 = sbr.rel (%p16) target = $region17
    $region16: #{loss_kpts2d.1} parent=1 // pred_region
      %s19 = scalar_lea.smem [#allocation2], 0
      %20 = sst [smem:[%s19]] 0.0
    $region17: #{loss_kpts2d.1} parent=1 // pred_fallthru
      _
    %v21 = vld [vmem:[%s1] sm:$0xff]
    %v22 = vld [vmem:[%s1 + $0x8] sm:$0xff]
    %v23 = vld [vmem:[%s1 + $0x10] sm:$0x1]
    %v24 = vld [vmem:[%s2] sm:$0xff]
    %v25 = vld [vmem:[%s2 + $0x8] sm:$0xff]
    %v26 = vld [vmem:[%s2 + $0x10] sm:$0x1]
    %v27 = vsub.f32 %v21, %v24
    %v28 = vsub.f32 %v22, %v25
    %v29 = vsub.f32 %v23, %v26
    %v30 = vand.u32 2147483647, %v27
    %v31 = vand.u32 2147483647, %v28
    %v32 = vand.u32 2147483647, %v29
    %s33 = scalar_lea.vmem %s1, 24
    %v34 = vld [vmem:[%s33] sm:$0xff]
    %v35 = vld [vmem:[%s33 + $0x8] sm:$0xff]
    %v36 = vld [vmem:[%s33 + $0x10] sm:$0x1]
    %s37 = scalar_lea.vmem %s2, 24
    %v38 = vld [vmem:[%s37] sm:$0xff]
    %v39 = vld [vmem:[%s37 + $0x8] sm:$0xff]
    %v40 = vld [vmem:[%s37 + $0x10] sm:$0x1]
    %v41 = vsub.f32 %v34, %v38
    %v42 = vsub.f32 %v35, %v39
    %v43 = vsub.f32 %v36, %v40
    %v44 = vand.u32 2147483647, %v41
    %v45 = vand.u32 2147483647, %v42
    %v46 = vand.u32 2147483647, %v43
    %v47 = vadd.f32 %v30, %v44
    %v48 = vadd.f32 %v31, %v45
    %v49 = vadd.f32 %v32, %v46
    %v50 = vld [vmem:[%s0] sm:$0xff]
    %v51 = vld [vmem:[%s0 + $0x8] sm:$0xff]
    %v52 = vld [vmem:[%s0 + $0x10] sm:$0x1]
    %54 = vset.pattern.permute.xlu0 0
    %55 = vperm.xlu0 %54, %v50
    %v56 = vpop.permute.xlu0 %55
    %59 = vset.pattern.permute.xlu0 0
    %60 = vperm.xlu0 %59, %v51
    %v61 = vpop.permute.xlu0 %60
    %64 = vset.pattern.permute.xlu0 0
    %65 = vperm.xlu0 %64, %v52
    %v66 = vpop.permute.xlu0 %65
    %vm68 = vcmp.gt.f32.partialorder %v47, %v56
    %vm69 = vcmp.gt.f32.partialorder %v48, %v61
    %vm70 = vcmp.gt.f32.partialorder %v49, %v66
    %v71 = vmul.f32 %v47, 0.001
    %v72 = vmul.f32 %v48, 0.001
    %v73 = vmul.f32 %v49, 0.001
    %v74 = vsel %vm68, %v47, %v71
    %v75 = vsel %vm69, %v48, %v72
    %v76 = vsel %vm70, %v49, %v73
    %s77 = sld [smem:[#allocation2]]
    %v78 = vadd.f32 %v74, %v75
    %vm79 = vcmask 1040384
    %v80 = vsel %vm79, %v76, 0.0
    %v81 = vadd.f32 %v78, %v80
    %82 = vadd.xlane.f32.xlu0 %v81
    %v83 = vpop.xlane.xlu0 %82
    %v84 = vrot.slane %v83, 4
    %v85 = vadd.f32 %v83, %v84
    %v86 = vrot.slane %v85, 2
    %v87 = vadd.f32 %v85, %v86
    %v88 = vrot.slane %v87, 1
    %v89 = vadd.f32 %v87, %v88
    %s90 = vtos %v89
    %s91 = sadd.f32 %s77, %s90
    %s92 = scalar_lea.smem [#allocation2], 0
    %93 = sst [smem:[%s92]] %s91
    // Predicated region
    $region18: #{loss_kpts2d.1} parent=1 // pred_check
      %p94 = pneg %p15
    $region19: #{loss_kpts2d.1} parent=1 // pred_check_branch
      %96 = sbr.rel (%p94) target = $region21
    $region20: #{loss_kpts2d.1} parent=1 // pred_region
      %s97 = sld [smem:[#allocation2]]
      %s98 = smul.f32 %s97, 0.007352941
      %99 = sst [smem:[%s92]] %s98
    $region21: #{loss_kpts2d.1} parent=1 // pred_fallthru
      _
    // Predicated region
    $region22: #{loss_kpts2d.1} parent=1 // pred_check
      _
    $region23: #{loss_kpts2d.1} parent=1 // pred_check_branch
      %101 = sbr.rel (0) target = $region25
    $region24: #{loss_kpts2d.1} parent=1 // pred_region
      %s103 = ssub.s32 16, 16
      %104 = vsyncadd [#allocation3], %s103
      %107 = dma.smem_to_hbm [#allocation2], 16, %s3, [#allocation3]
    $region25: #{loss_kpts2d.1} parent=1 // pred_fallthru
      _
    // Predicated region
    $region26: #{loss_kpts2d.1} parent=1 // pred_check
      _
    $region27: #{loss_kpts2d.1} parent=1 // pred_check_branch
      %109 = sbr.rel (0) target = $region29
    $region28: #{loss_kpts2d.1} parent=1 // pred_region
      %110 = dma.done [#allocation3], 16
    $region29: #{loss_kpts2d.1} parent=1 // pred_fallthru
      _
    %111 = sfence
    %112 = vsyncpa [#allocation3], 1

</llo_original>
